<compile_context>
chip_gen: v6e
topology: v6e:2x2x1
jax: 0.10.0
libtpu: 0.0.40
codegen_flags: <defaults>
</compile_context>

<pallas_src>
import jax
import jax.numpy as jnp
from jax import lax
from jax.experimental import pallas as pl
from jax.experimental.pallas import tpu as pltpu


def _round_up(x, m):
    return ((x + m - 1) // m) * m


def _choose_tiling(B, bm_max=512):
    """Pick (bm, Bp, n_programs). bm is a multiple of 128 (lane axis); for B > 128
    the program count is forced even and >= 2 so v7x megacore shards the batch."""
    if B <= 128:
        bm, n = 128, 1
    else:
        n = pl.cdiv(B, bm_max)
        n = max(2, n + (n % 2))            # even, >= 2 programs
        bm = _round_up(pl.cdiv(B, n), 128) # lane-aligned tile
    return bm, n * bm, n


def _actor_kernel(xT_ref, w1t_ref, b1t_ref, w2t_ref, b2t_ref, w3t_ref, b3t_ref, o_ref):
    # All activations are (feat, bm): batch on lanes, features on sublanes.
    # Layer 1: (H1, S) @ (S, bm) + (H1, 1) -> ReLU
    h = jnp.dot(w1t_ref[...], xT_ref[...], preferred_element_type=jnp.float32)
    h = jnp.maximum(h + b1t_ref[...], 0.0)
    # Layer 2: (H2, H1) @ (H1, bm) + (H2, 1) -> ReLU
    h = jnp.dot(w2t_ref[...], h, preferred_element_type=jnp.float32)
    h = jnp.maximum(h + b2t_ref[...], 0.0)
    # Layer 3: (2, H2) @ (H2, bm) + (2, 1)  -> (2, bm): row 0 = mu, row 1 = sigma_raw
    y = jnp.dot(w3t_ref[...], h, preferred_element_type=jnp.float32) + b3t_ref[...]

    # softplus (torch semantics: beta=1, threshold=20) on row 1 only; row 0 identity.
    # The whole tile is only (2, bm) = bm/128 vregs, so the EUP work is tiny.
    sp = jnp.where(y > 20.0, y, jnp.log1p(jnp.exp(jnp.minimum(y, 20.0))))
    row = lax.broadcasted_iota(jnp.int32, y.shape, dimension=0)
    o_ref[...] = jnp.where(row == 1, sp, y).astype(o_ref.dtype)


def prepare_actor_params(params):
    """One-time transform: transpose weights / reshape biases for the batch-on-lanes
    kernel layout. Call once (e.g. right after init / weight update)."""
    return {
        "w1t": params["w1"].T, "b1t": params["b1"].reshape(-1, 1),
        "w2t": params["w2"].T, "b2t": params["b2"].reshape(-1, 1),
        "w3t": params["w3"].T, "b3t": params["b3"].reshape(-1, 1),
    }


def actor_forward(x, tparams, *, bm=None):
    """x: [B, state_dim] float32. tparams: output of prepare_actor_params().
    Returns [B, 2] = [mu, softplus(sigma)]."""
    B, S = x.shape
    w1t, b1t = tparams["w1t"], tparams["b1t"]
    w2t, b2t = tparams["w2t"], tparams["b2t"]
    w3t, b3t = tparams["w3t"], tparams["b3t"]
    H1, H2, O = w1t.shape[0], w2t.shape[0], w3t.shape[0]

    if bm is None:
        bm, Bp, n = _choose_tiling(B)
    else:
        bm = _round_up(bm, 128)
        Bp = _round_up(B, bm)
        n = Bp // bm

    # Batch onto the lane axis: (S, Bp), zero-padded tail columns (discarded later).
    xT = x.T
    if Bp != B:
        xT = jnp.pad(xT, ((0, 0), (0, Bp - B)))

    full = lambda shape: pl.BlockSpec(shape, lambda i: (0, 0))  # resident weights

    out = pl.pallas_call(
        _actor_kernel,
        out_shape=jax.ShapeDtypeStruct((O, Bp), jnp.float32),
        grid_spec=pltpu.PrefetchScalarGridSpec(
            num_scalar_prefetch=0,
            grid=(n,),
            in_specs=[
                pl.BlockSpec((S, bm), lambda i: (0, i)),   # x^T tile over batch lanes
                full((H1, S)), full((H1, 1)),              # layer 1 (transposed)
                full((H2, H1)), full((H2, 1)),             # layer 2
                full((O, H2)), full((O, 1)),               # layer 3
            ],
            out_specs=pl.BlockSpec((O, bm), lambda i: (0, i)),
        ),
        compiler_params=pltpu.CompilerParams(dimension_semantics=("parallel",)),
    )(xT, w1t, b1t, w2t, b2t, w3t, b3t)

    return out[:, :B].T  # (B, 2); tiny (8 B/row) transpose, no padded-slab slice pass


def init_actor_params(key, state_dim, l1_dim=50, l2_dim=50, out_dim=2):
    ks = jax.random.split(key, 6)

    def lin(kw, kb, fan_in, fan_out):
        # roughly matching nn.Linear's uniform(-1/sqrt(fan_in), 1/sqrt(fan_in))
        bound = 1.0 / jnp.sqrt(fan_in)
        w = jax.random.uniform(kw, (fan_in, fan_out), jnp.float32, -bound, bound)
        b = jax.random.uniform(kb, (1, fan_out), jnp.float32, -bound, bound)
        return w, b

    w1, b1 = lin(ks[0], ks[1], state_dim, l1_dim)
    w2, b2 = lin(ks[2], ks[3], l1_dim, l2_dim)
    w3, b3 = lin(ks[4], ks[5], l2_dim, out_dim)
    return {"w1": w1, "b1": b1, "w2": w2, "b2": b2, "w3": w3, "b3": b3}


def actor_ref(x, p):
    h = jnp.maximum(x @ p["w1"] + p["b1"], 0.0)
    h = jnp.maximum(h @ p["w2"] + p["b2"], 0.0)
    y = h @ p["w3"] + p["b3"]
    mu = y[:, 0]
    sigma = jax.nn.softplus(y[:, 1])
    return jnp.stack((mu, sigma), axis=1)


if __name__ == "__main__":
    key = jax.random.PRNGKey(0)
    k_params, k_x1, k_x2 = jax.random.split(key, 3)

    state_dim = 3  # pendulum observation: [cos(theta), sin(theta), theta_dot]

    params = init_actor_params(k_params, state_dim)
    tparams = prepare_actor_params(params)  # one-time weight transpose

    # Small batch, not a multiple of 8/128 -> exercises padded-tail, single-program grid.
    x_small = jax.random.normal(k_x1, (6, state_dim), jnp.float32)
    out_small = jax.block_until_ready(actor_forward(x_small, tparams))
    ref_small = actor_ref(x_small, params)
    assert out_small.shape == (6, 2), out_small.shape
    assert jnp.allclose(out_small, ref_small, atol=1e-5, rtol=1e-5), (out_small, ref_small)

    # Larger batch -> exercises even >=2-program grid (v7x megacore path) + padding.
    x_big = jax.random.normal(k_x2, (300, state_dim), jnp.float32)
    out_big = jax.block_until_ready(actor_forward(x_big, tparams))
    ref_big = actor_ref(x_big, params)
    assert out_big.shape == (300, 2), out_big.shape
    assert jnp.allclose(out_big, ref_big, atol=1e-5, rtol=1e-5), (out_big, ref_big)

    print("KERNEL_OK")
</pallas_src>

<mosaic_0001>
module attributes {stable_mosaic.version = 11 : i64} {
  func.func @_actor_kernel(%arg0: i32, %arg1: memref<3x128xf32, #tpu.memory_space<vmem>>, %arg2: memref<50x3xf32, #tpu.memory_space<vmem>>, %arg3: memref<50x1xf32, #tpu.memory_space<vmem>>, %arg4: memref<50x50xf32, #tpu.memory_space<vmem>>, %arg5: memref<50x1xf32, #tpu.memory_space<vmem>>, %arg6: memref<2x50xf32, #tpu.memory_space<vmem>>, %arg7: memref<2x1xf32, #tpu.memory_space<vmem>>, %arg8: memref<2x128xf32, #tpu.memory_space<vmem>>) attributes {dimension_semantics = [#tpu.dimension_semantics<parallel>], iteration_bounds = array<i64: 1>, scalar_prefetch = 0 : i64, scratch_operands = 0 : i64, tpu.core_type = #tpu.core_type<tc>, window_params = [{transform_indices = @transform_0, window_bounds = array<i64: 3, 128>}, {pipeline_mode = #tpu.pipeline_mode<synchronous>, transform_indices = @transform_1, window_bounds = array<i64: 50, 3>}, {pipeline_mode = #tpu.pipeline_mode<synchronous>, transform_indices = @transform_2, window_bounds = array<i64: 50, 1>}, {pipeline_mode = #tpu.pipeline_mode<synchronous>, transform_indices = @transform_3, window_bounds = array<i64: 50, 50>}, {pipeline_mode = #tpu.pipeline_mode<synchronous>, transform_indices = @transform_4, window_bounds = array<i64: 50, 1>}, {pipeline_mode = #tpu.pipeline_mode<synchronous>, transform_indices = @transform_5, window_bounds = array<i64: 2, 50>}, {pipeline_mode = #tpu.pipeline_mode<synchronous>, transform_indices = @transform_6, window_bounds = array<i64: 2, 1>}, {transform_indices = @transform_7, window_bounds = array<i64: 2, 128>}]} {
    %c0 = arith.constant 0 : index
    %c0_0 = arith.constant 0 : index
    %0 = vector.load %arg2[%c0, %c0_0] : memref<50x3xf32, #tpu.memory_space<vmem>>, vector<50x3xf32>
    %c0_1 = arith.constant 0 : index
    %c0_2 = arith.constant 0 : index
    %1 = vector.load %arg1[%c0_1, %c0_2] : memref<3x128xf32, #tpu.memory_space<vmem>>, vector<3x128xf32>
    %cst = arith.constant dense<0.000000e+00> : vector<50x128xf32>
    %2 = tpu.matmul %0, %1, %cst {dimension_numbers = #tpu.dot_dimension_numbers<[1], [0], [0], [1], [0, 0, 1, 1], [], []>} : vector<50x3xf32>, vector<3x128xf32>, vector<50x128xf32> -> vector<50x128xf32>
    %c0_3 = arith.constant 0 : index
    %c0_4 = arith.constant 0 : index
    %3 = vector.load %arg3[%c0_3, %c0_4] : memref<50x1xf32, #tpu.memory_space<vmem>>, vector<50x1xf32>
    %4 = vector.broadcast %3 : vector<50x1xf32> to vector<50x128xf32>
    %5 = arith.addf %2, %4 : vector<50x128xf32>
    %cst_5 = arith.constant 0.000000e+00 : f32
    %6 = vector.broadcast %cst_5 : f32 to vector<50x128xf32>
    %7 = arith.maximumf %5, %6 : vector<50x128xf32>
    %c0_6 = arith.constant 0 : index
    %c0_7 = arith.constant 0 : index
    %8 = vector.load %arg4[%c0_6, %c0_7] : memref<50x50xf32, #tpu.memory_space<vmem>>, vector<50x50xf32>
    %cst_8 = arith.constant dense<0.000000e+00> : vector<50x128xf32>
    %9 = tpu.matmul %8, %7, %cst_8 {dimension_numbers = #tpu.dot_dimension_numbers<[1], [0], [0], [1], [0, 0, 1, 1], [], []>} : vector<50x50xf32>, vector<50x128xf32>, vector<50x128xf32> -> vector<50x128xf32>
    %c0_9 = arith.constant 0 : index
    %c0_10 = arith.constant 0 : index
    %10 = vector.load %arg5[%c0_9, %c0_10] : memref<50x1xf32, #tpu.memory_space<vmem>>, vector<50x1xf32>
    %11 = vector.broadcast %10 : vector<50x1xf32> to vector<50x128xf32>
    %12 = arith.addf %9, %11 : vector<50x128xf32>
    %cst_11 = arith.constant 0.000000e+00 : f32
    %13 = vector.broadcast %cst_11 : f32 to vector<50x128xf32>
    %14 = arith.maximumf %12, %13 : vector<50x128xf32>
    %c0_12 = arith.constant 0 : index
    %c0_13 = arith.constant 0 : index
    %15 = vector.load %arg6[%c0_12, %c0_13] : memref<2x50xf32, #tpu.memory_space<vmem>>, vector<2x50xf32>
    %cst_14 = arith.constant dense<0.000000e+00> : vector<2x128xf32>
    %16 = tpu.matmul %15, %14, %cst_14 {dimension_numbers = #tpu.dot_dimension_numbers<[1], [0], [0], [1], [0, 0, 1, 1], [], []>} : vector<2x50xf32>, vector<50x128xf32>, vector<2x128xf32> -> vector<2x128xf32>
    %c0_15 = arith.constant 0 : index
    %c0_16 = arith.constant 0 : index
    %17 = vector.load %arg7[%c0_15, %c0_16] : memref<2x1xf32, #tpu.memory_space<vmem>>, vector<2x1xf32>
    %18 = vector.broadcast %17 : vector<2x1xf32> to vector<2x128xf32>
    %19 = arith.addf %16, %18 : vector<2x128xf32>
    %cst_17 = arith.constant 2.000000e+01 : f32
    %20 = vector.broadcast %cst_17 : f32 to vector<2x128xf32>
    %21 = arith.cmpf ogt, %19, %20 : vector<2x128xf32>
    %cst_18 = arith.constant 2.000000e+01 : f32
    %22 = vector.broadcast %cst_18 : f32 to vector<2x128xf32>
    %23 = arith.minimumf %19, %22 : vector<2x128xf32>
    %24 = math.exp %23 : vector<2x128xf32>
    %25 = math.log1p %24 : vector<2x128xf32>
    %26 = arith.select %21, %19, %25 : vector<2x128xi1>, vector<2x128xf32>
    %27 = tpu.iota {dimensions = array<i32: 0>} : vector<2x128xi32>
    %c1_i32 = arith.constant 1 : i32
    %28 = vector.broadcast %c1_i32 : i32 to vector<2x128xi32>
    %29 = arith.cmpi eq, %27, %28 : vector<2x128xi32>
    %30 = arith.select %29, %26, %19 : vector<2x128xi1>, vector<2x128xf32>
    %c0_19 = arith.constant 0 : index
    %c0_20 = arith.constant 0 : index
    %31 = vector.load %arg8[%c0_19, %c0_20] : memref<2x128xf32, #tpu.memory_space<vmem>>, vector<2x128xf32>
    tpu.vector_store %arg8[%c0_19, %c0_20], %30 {strides = array<i32>} : memref<2x128xf32, #tpu.memory_space<vmem>>, vector<2x128xf32>,
    return
  }
  func.func @transform_0(%arg0: i32) -> (i32, i32) {
    %c0_i32 = arith.constant 0 : i32
    %c0_i32_0 = arith.constant 0 : i32
    return %c0_i32, %arg0 : i32, i32
  }
  func.func @transform_1(%arg0: i32) -> (i32, i32) {
    %c0_i32 = arith.constant 0 : i32
    %c0_i32_0 = arith.constant 0 : i32
    %c0_i32_1 = arith.constant 0 : i32
    return %c0_i32, %c0_i32_0 : i32, i32
  }
  func.func @transform_2(%arg0: i32) -> (i32, i32) {
    %c0_i32 = arith.constant 0 : i32
    %c0_i32_0 = arith.constant 0 : i32
    %c0_i32_1 = arith.constant 0 : i32
    return %c0_i32, %c0_i32_0 : i32, i32
  }
  func.func @transform_3(%arg0: i32) -> (i32, i32) {
    %c0_i32 = arith.constant 0 : i32
    %c0_i32_0 = arith.constant 0 : i32
    %c0_i32_1 = arith.constant 0 : i32
    return %c0_i32, %c0_i32_0 : i32, i32
  }
  func.func @transform_4(%arg0: i32) -> (i32, i32) {
    %c0_i32 = arith.constant 0 : i32
    %c0_i32_0 = arith.constant 0 : i32
    %c0_i32_1 = arith.constant 0 : i32
    return %c0_i32, %c0_i32_0 : i32, i32
  }
  func.func @transform_5(%arg0: i32) -> (i32, i32) {
    %c0_i32 = arith.constant 0 : i32
    %c0_i32_0 = arith.constant 0 : i32
    %c0_i32_1 = arith.constant 0 : i32
    return %c0_i32, %c0_i32_0 : i32, i32
  }
  func.func @transform_6(%arg0: i32) -> (i32, i32) {
    %c0_i32 = arith.constant 0 : i32
    %c0_i32_0 = arith.constant 0 : i32
    %c0_i32_1 = arith.constant 0 : i32
    return %c0_i32, %c0_i32_0 : i32, i32
  }
  func.func @transform_7(%arg0: i32) -> (i32, i32) {
    %c0_i32 = arith.constant 0 : i32
    %c0_i32_0 = arith.constant 0 : i32
    return %c0_i32, %arg0 : i32, i32
  }
}

</mosaic_0001>

<llo_original>
// kernel: tpu_custom_call.1
$region0: #{tpu_custom_call.1}
  #allocation0 [shape = 'u32[]', space=smem, size = 0x4, offset = 0x4, fixed_abs, tag = 'smem constant byte address 0x4 - core index']
  #allocation1 [shape = 'u32[144,128]{1,0:T(1,128)}', space=vmem, size = 0x12000, scoped, tag = 'internal scratch']
  %s0 = inlined_call_operand.vmem [shape: f32[3,128], index: 0, kind: input, shape index: {}]
  %s1 = inlined_call_operand.vmem [shape: f32[50,3], index: 1, kind: input, shape index: {}]
  %s2 = inlined_call_operand.vmem [shape: f32[50,1], index: 2, kind: input, shape index: {}]
  %s3 = inlined_call_operand.vmem [shape: f32[50,50], index: 3, kind: input, shape index: {}]
  %s4 = inlined_call_operand.vmem [shape: f32[50,1], index: 4, kind: input, shape index: {}]
  %s5 = inlined_call_operand.vmem [shape: f32[2,50], index: 5, kind: input, shape index: {}]
  %s6 = inlined_call_operand.vmem [shape: f32[2,1], index: 6, kind: input, shape index: {}]
  %s7 = inlined_call_operand.hbm [shape: f32[2,128], index: 7, kind: output, shape index: {}]
  %s8 = sld [smem:[#allocation0]]
  $region38: #{tpu_custom_call.1} parent=0
    _
  %s10 = ssub.s32 1, %s8
  %s11 = scalar_select 0, %s10, %s8
  $region1: #{tpu_custom_call.1} parent=0
    #allocation2 [shape = 'u8[1024]{0}', space=vmem, size = 0x400, scoped, tag = 'output window, operand 0, single buffered']
    #allocation3 [shape = 's32[1]{0}', space=sflag, size = 0x4, scoped, tag = 'scoped memory for tpu_custom_call.1']
    %12 = vsyncpa [#allocation3], 0
    // Predicated region
    $region2: #{tpu_custom_call.1} parent=1 // pred_check
      _
    $region3: #{tpu_custom_call.1} parent=1 // pred_check_branch
      %14 = sbr.rel (0) target = $region5
    $region4: #{tpu_custom_call.1} parent=1 // pred_region
      _
    $region5: #{tpu_custom_call.1} parent=1 // pred_fallthru
      _
    // Predicated region
    $region6: #{tpu_custom_call.1} parent=1 // pred_check
      _
    $region7: #{tpu_custom_call.1} parent=1 // pred_check_branch
      %16 = sbr.rel (0) target = $region9
    $region8: #{tpu_custom_call.1} parent=1 // pred_region
      _
    $region9: #{tpu_custom_call.1} parent=1 // pred_fallthru
      _
    // Predicated region
    $region10: #{tpu_custom_call.1} parent=1 // pred_check
      _
    $region11: #{tpu_custom_call.1} parent=1 // pred_check_branch
      %18 = sbr.rel (0) target = $region13
    $region12: #{tpu_custom_call.1} parent=1 // pred_region
      _
    $region13: #{tpu_custom_call.1} parent=1 // pred_fallthru
      _
    // Predicated region
    $region14: #{tpu_custom_call.1} parent=1 // pred_check
      _
    $region15: #{tpu_custom_call.1} parent=1 // pred_check_branch
      %20 = sbr.rel (0) target = $region17
    $region16: #{tpu_custom_call.1} parent=1 // pred_region
      _
    $region17: #{tpu_custom_call.1} parent=1 // pred_fallthru
      _
    // Predicated region
    $region18: #{tpu_custom_call.1} parent=1 // pred_check
      _
    $region19: #{tpu_custom_call.1} parent=1 // pred_check_branch
      %22 = sbr.rel (0) target = $region21
    $region20: #{tpu_custom_call.1} parent=1 // pred_region
      _
    $region21: #{tpu_custom_call.1} parent=1 // pred_fallthru
      _
    // Predicated region
    $region22: #{tpu_custom_call.1} parent=1 // pred_check
      _
    $region23: #{tpu_custom_call.1} parent=1 // pred_check_branch
      %24 = sbr.rel (0) target = $region25
    $region24: #{tpu_custom_call.1} parent=1 // pred_region
      _
    $region25: #{tpu_custom_call.1} parent=1 // pred_fallthru
      _
    // Predicated region
    $region26: #{tpu_custom_call.1} parent=1 // pred_check
      _
    $region27: #{tpu_custom_call.1} parent=1 // pred_check_branch
      %26 = sbr.rel (0) target = $region29
    $region28: #{tpu_custom_call.1} parent=1 // pred_region
      _
    $region29: #{tpu_custom_call.1} parent=1 // pred_fallthru
      _
    %v27 = vld [vmem:[%s1] sm:$0xff]
    %v28 = vld [vmem:[%s1 + $0x8] sm:$0xff]
    %v29 = vld [vmem:[%s1 + $0x10] sm:$0xff]
    %v30 = vld [vmem:[%s1 + $0x18] sm:$0xff]
    %v31 = vld [vmem:[%s1 + $0x20] sm:$0xff]
    %v32 = vld [vmem:[%s1 + $0x28] sm:$0xff]
    %v33 = vld [vmem:[%s1 + $0x30] sm:$0x3]
    %v34 = vld [vmem:[%s0] sm:$0x7]
    %v35 = vld [vmem:[%s2] sm:$0xff]
    %v36 = vld [vmem:[%s2 + $0x8] sm:$0xff]
    %v37 = vld [vmem:[%s2 + $0x10] sm:$0xff]
    %v38 = vld [vmem:[%s2 + $0x18] sm:$0xff]
    %v39 = vld [vmem:[%s2 + $0x20] sm:$0xff]
    %v40 = vld [vmem:[%s2 + $0x28] sm:$0xff]
    %v41 = vld [vmem:[%s2 + $0x30] sm:$0x3]
    %43 = vset.pattern.permute.xlu0 0
    %44 = vperm.xlu0 %43, %v35
    %v45 = vpop.permute.xlu0 %44
    %48 = vset.pattern.permute.xlu0 0
    %49 = vperm.xlu0 %48, %v36
    %v50 = vpop.permute.xlu0 %49
    %53 = vset.pattern.permute.xlu0 0
    %54 = vperm.xlu0 %53, %v37
    %v55 = vpop.permute.xlu0 %54
    %58 = vset.pattern.permute.xlu0 0
    %59 = vperm.xlu0 %58, %v38
    %v60 = vpop.permute.xlu0 %59
    %63 = vset.pattern.permute.xlu0 0
    %64 = vperm.xlu0 %63, %v39
    %v65 = vpop.permute.xlu0 %64
    %68 = vset.pattern.permute.xlu0 0
    %69 = vperm.xlu0 %68, %v40
    %v70 = vpop.permute.xlu0 %69
    %73 = vset.pattern.permute.xlu0 0
    %74 = vperm.xlu0 %73, %v41
    %v75 = vpop.permute.xlu0 %74
    %vm77 = vcmask 23552
    %v79 = vsel %vm77, %v27, 0
    %v82 = vsel %vm77, %v28, 0
    %v85 = vsel %vm77, %v29, 0
    %v88 = vsel %vm77, %v30, 0
    %v91 = vsel %vm77, %v31, 0
    %v94 = vsel %vm77, %v32, 0
    %v97 = vsel %vm77, %v33, 0
    %vm99 = vcmask 1042432
    %v101 = vsel %vm99, %v34, 0
    %103 = vmatprep.subr.mxu0 0.0
    %104 = vmatpush1.msra.mxu0 0.0
    %105 = vmatprep.subr.mxu0 0.0
    %106 = vmatpush1.msra.mxu0 0.0
    %107 = vmatprep.subr.mxu0 0.0
    %108 = vmatpush1.msra.mxu0 0.0
    %109 = vmatprep.subr.mxu0 0.0
    %110 = vmatpush1.msra.mxu0 0.0
    %111 = vmatprep.subr.mxu0 0.0
    %112 = vmatpush1.msra.mxu0 0.0
    %113 = vmatprep.subr.mxu0 0.0
    %114 = vmatpush1.msra.mxu0 0.0
    %115 = vmatprep.subr.mxu0 0.0
    %116 = vmatpush1.msra.mxu0 0.0
    %117 = vmatprep.subr.mxu0 0.0
    %118 = vmatpush1.msra.mxu0 0.0
    %119 = vmatprep.subr.mxu0 0.0
    %120 = vmatpush1.msra.mxu0 0.0
    %121 = vmatprep.subr.mxu0 0.0
    %122 = vmatpush1.msra.mxu0 0.0
    %123 = vmatprep.subr.mxu0 0.0
    %124 = vmatpush1.msra.mxu0 0.0
    %125 = vmatprep.subr.mxu0 0.0
    %126 = vmatpush1.msra.mxu0 0.0
    %127 = vmatprep.subr.mxu0 0.0
    %128 = vmatpush1.msra.mxu0 0.0
    %129 = vmatprep.subr.mxu0 0.0
    %130 = vmatpush1.msra.mxu0 0.0
    %131 = vmatprep.subr.mxu0 0.0
    %132 = vmatpush1.msra.mxu0 0.0
    %133 = vmatprep.subr.mxu0 0.0
    %134 = vmatpush1.msra.mxu0 %v101
    %135 = vmatprep.subr.mxu0 0.0
    %136 = vmatpush2.msra.mxu0 0.0
    %137 = vmatprep.subr.mxu0 0.0
    %138 = vmatpush2.msra.mxu0 0.0
    %139 = vmatprep.subr.mxu0 0.0
    %140 = vmatpush2.msra.mxu0 0.0
    %141 = vmatprep.subr.mxu0 0.0
    %142 = vmatpush2.msra.mxu0 0.0
    %143 = vmatprep.subr.mxu0 0.0
    %144 = vmatpush2.msra.mxu0 0.0
    %145 = vmatprep.subr.mxu0 0.0
    %146 = vmatpush2.msra.mxu0 0.0
    %147 = vmatprep.subr.mxu0 0.0
    %148 = vmatpush2.msra.mxu0 0.0
    %149 = vmatprep.subr.mxu0 0.0
    %150 = vmatpush2.msra.mxu0 0.0
    %151 = vmatprep.subr.mxu0 0.0
    %152 = vmatpush2.msra.mxu0 0.0
    %153 = vmatprep.subr.mxu0 0.0
    %154 = vmatpush2.msra.mxu0 0.0
    %155 = vmatprep.subr.mxu0 0.0
    %156 = vmatpush2.msra.mxu0 0.0
    %157 = vmatprep.subr.mxu0 0.0
    %158 = vmatpush2.msra.mxu0 0.0
    %159 = vmatprep.subr.mxu0 0.0
    %160 = vmatpush2.msra.mxu0 0.0
    %161 = vmatprep.subr.mxu0 0.0
    %162 = vmatpush2.msra.mxu0 0.0
    %163 = vmatprep.subr.mxu0 0.0
    %164 = vmatpush2.msra.mxu0 0.0
    %165 = vmatprep.subr.mxu0 0.0
    %166 = vmatpush2.msra.mxu0 0.0
    %167 = vmatprep.mubr.f32.mxu0 0.0
    %168 = vmatmul.mubr.f32.gmra.mxu0 %v79
    %v169 = vpop.f32.mrf.mxu0
    %v170 = vadd.f32 %v45, %v169
    %v171 = vpop.f32.mrf.mxu0
    %172 = vmatprep.mubr.f32.mxu0 0.0
    %173 = vmatmul.mubr.f32.gmra.mxu0 %v82
    %v174 = vpop.f32.mrf.mxu0
    %v175 = vadd.f32 %v50, %v174
    %v176 = vpop.f32.mrf.mxu0
    %177 = vmatprep.mubr.f32.mxu0 0.0
    %178 = vmatmul.mubr.f32.gmra.mxu0 %v85
    %v179 = vpop.f32.mrf.mxu0
    %v180 = vadd.f32 %v55, %v179
    %v181 = vpop.f32.mrf.mxu0
    %182 = vmatprep.mubr.f32.mxu0 0.0
    %183 = vmatmul.mubr.f32.gmra.mxu0 %v88
    %v184 = vpop.f32.mrf.mxu0
    %v185 = vadd.f32 %v60, %v184
    %v186 = vpop.f32.mrf.mxu0
    %187 = vmatprep.mubr.f32.mxu0 0.0
    %188 = vmatmul.mubr.f32.gmra.mxu0 %v91
    %v189 = vpop.f32.mrf.mxu0
    %v190 = vadd.f32 %v65, %v189
    %v191 = vpop.f32.mrf.mxu0
    %192 = vmatprep.mubr.f32.mxu0 0.0
    %193 = vmatmul.mubr.f32.gmra.mxu0 %v94
    %v194 = vpop.f32.mrf.mxu0
    %v195 = vadd.f32 %v70, %v194
    %v196 = vpop.f32.mrf.mxu0
    %197 = vmatprep.mubr.f32.mxu0 0.0
    %198 = vmatmul.mubr.f32.gmra.mxu0 %v97
    %v199 = vpop.f32.mrf.mxu0
    %v200 = vadd.f32 %v75, %v199
    %v201 = vpop.f32.mrf.mxu0
    %202 = vdwg.mxu0
    %v203 = vmax.f32 %v170, 0.0
    %v204 = vmax.f32 %v175, 0.0
    %v205 = vmax.f32 %v180, 0.0
    %v206 = vmax.f32 %v185, 0.0
    %v207 = vmax.f32 %v190, 0.0
    %v208 = vmax.f32 %v195, 0.0
    %v209 = vmax.f32 %v200, 0.0
    %v210 = vld [vmem:[%s3] sm:$0xff]
    %v211 = vld [vmem:[%s3 + $0x8] sm:$0xff]
    %v212 = vld [vmem:[%s3 + $0x10] sm:$0xff]
    %v213 = vld [vmem:[%s3 + $0x18] sm:$0xff]
    %v214 = vld [vmem:[%s3 + $0x20] sm:$0xff]
    %v215 = vld [vmem:[%s3 + $0x28] sm:$0xff]
    %v216 = vld [vmem:[%s3 + $0x30] sm:$0x3]
    %v217 = vld [vmem:[%s4] sm:$0xff]
    %v218 = vld [vmem:[%s4 + $0x8] sm:$0xff]
    %v219 = vld [vmem:[%s4 + $0x10] sm:$0xff]
    %v220 = vld [vmem:[%s4 + $0x18] sm:$0xff]
    %v221 = vld [vmem:[%s4 + $0x20] sm:$0xff]
    %v222 = vld [vmem:[%s4 + $0x28] sm:$0xff]
    %v223 = vld [vmem:[%s4 + $0x30] sm:$0x3]
    %225 = vset.pattern.permute.xlu0 0
    %226 = vperm.xlu0 %225, %v217
    %v227 = vpop.permute.xlu0 %226
    %230 = vset.pattern.permute.xlu0 0
    %231 = vperm.xlu0 %230, %v218
    %v232 = vpop.permute.xlu0 %231
    %235 = vset.pattern.permute.xlu0 0
    %236 = vperm.xlu0 %235, %v219
    %v237 = vpop.permute.xlu0 %236
    %240 = vset.pattern.permute.xlu0 0
    %241 = vperm.xlu0 %240, %v220
    %v242 = vpop.permute.xlu0 %241
    %245 = vset.pattern.permute.xlu0 0
    %246 = vperm.xlu0 %245, %v221
    %v247 = vpop.permute.xlu0 %246
    %250 = vset.pattern.permute.xlu0 0
    %251 = vperm.xlu0 %250, %v222
    %v252 = vpop.permute.xlu0 %251
    %255 = vset.pattern.permute.xlu0 0
    %256 = vperm.xlu0 %255, %v223
    %v257 = vpop.permute.xlu0 %256
    %vm259 = vcmask 408576
    %v261 = vsel %vm259, %v210, 0
    %v264 = vsel %vm259, %v211, 0
    %v267 = vsel %vm259, %v212, 0
    %v270 = vsel %vm259, %v213, 0
    %v273 = vsel %vm259, %v214, 0
    %v276 = vsel %vm259, %v215, 0
    %v279 = vsel %vm259, %v216, 0
    %vm281 = vcmask 1041408
    %v283 = vsel %vm281, %v209, 0
    %285 = vmatprep.subr.mxu0 0.0
    %286 = vmatpush1.msra.mxu0 0.0
    %287 = vmatprep.subr.mxu0 0.0
    %288 = vmatpush1.msra.mxu0 0.0
    %289 = vmatprep.subr.mxu0 0.0
    %290 = vmatpush1.msra.mxu0 0.0
    %291 = vmatprep.subr.mxu0 0.0
    %292 = vmatpush1.msra.mxu0 0.0
    %293 = vmatprep.subr.mxu0 0.0
    %294 = vmatpush1.msra.mxu0 0.0
    %295 = vmatprep.subr.mxu0 0.0
    %296 = vmatpush1.msra.mxu0 0.0
    %297 = vmatprep.subr.mxu0 0.0
    %298 = vmatpush1.msra.mxu0 0.0
    %299 = vmatprep.subr.mxu0 0.0
    %300 = vmatpush1.msra.mxu0 0.0
    %301 = vmatprep.subr.mxu0 0.0
    %302 = vmatpush1.msra.mxu0 0.0
    %303 = vmatprep.subr.mxu0 0.0
    %304 = vmatpush1.msra.mxu0 %v283
    %305 = vmatprep.subr.mxu0 0.0
    %306 = vmatpush1.msra.mxu0 %v208
    %307 = vmatprep.subr.mxu0 0.0
    %308 = vmatpush1.msra.mxu0 %v207
    %309 = vmatprep.subr.mxu0 0.0
    %310 = vmatpush1.msra.mxu0 %v206
    %311 = vmatprep.subr.mxu0 0.0
    %312 = vmatpush1.msra.mxu0 %v205
    %313 = vmatprep.subr.mxu0 0.0
    %314 = vmatpush1.msra.mxu0 %v204
    %315 = vmatprep.subr.mxu0 0.0
    %316 = vmatpush1.msra.mxu0 %v203
    %317 = vmatprep.subr.mxu0 0.0
    %318 = vmatpush2.msra.mxu0 0.0
    %319 = vmatprep.subr.mxu0 0.0
    %320 = vmatpush2.msra.mxu0 0.0
    %321 = vmatprep.subr.mxu0 0.0
    %322 = vmatpush2.msra.mxu0 0.0
    %323 = vmatprep.subr.mxu0 0.0
    %324 = vmatpush2.msra.mxu0 0.0
    %325 = vmatprep.subr.mxu0 0.0
    %326 = vmatpush2.msra.mxu0 0.0
    %327 = vmatprep.subr.mxu0 0.0
    %328 = vmatpush2.msra.mxu0 0.0
    %329 = vmatprep.subr.mxu0 0.0
    %330 = vmatpush2.msra.mxu0 0.0
    %331 = vmatprep.subr.mxu0 0.0
    %332 = vmatpush2.msra.mxu0 0.0
    %333 = vmatprep.subr.mxu0 0.0
    %334 = vmatpush2.msra.mxu0 0.0
    %335 = vmatprep.subr.mxu0 0.0
    %336 = vmatpush2.msra.mxu0 0.0
    %337 = vmatprep.subr.mxu0 0.0
    %338 = vmatpush2.msra.mxu0 0.0
    %339 = vmatprep.subr.mxu0 0.0
    %340 = vmatpush2.msra.mxu0 0.0
    %341 = vmatprep.subr.mxu0 0.0
    %342 = vmatpush2.msra.mxu0 0.0
    %343 = vmatprep.subr.mxu0 0.0
    %344 = vmatpush2.msra.mxu0 0.0
    %345 = vmatprep.subr.mxu0 0.0
    %346 = vmatpush2.msra.mxu0 0.0
    %347 = vmatprep.subr.mxu0 0.0
    %348 = vmatpush2.msra.mxu0 0.0
    %349 = vmatprep.mubr.f32.mxu0 0.0
    %350 = vmatmul.mubr.f32.gmra.mxu0 %v261
    %v351 = vpop.f32.mrf.mxu0
    %v352 = vadd.f32 %v227, %v351
    %v353 = vpop.f32.mrf.mxu0
    %354 = vmatprep.mubr.f32.mxu0 0.0
    %355 = vmatmul.mubr.f32.gmra.mxu0 %v264
    %v356 = vpop.f32.mrf.mxu0
    %v357 = vadd.f32 %v232, %v356
    %v358 = vpop.f32.mrf.mxu0
    %359 = vmatprep.mubr.f32.mxu0 0.0
    %360 = vmatmul.mubr.f32.gmra.mxu0 %v267
    %v361 = vpop.f32.mrf.mxu0
    %v362 = vadd.f32 %v237, %v361
    %v363 = vpop.f32.mrf.mxu0
    %364 = vmatprep.mubr.f32.mxu0 0.0
    %365 = vmatmul.mubr.f32.gmra.mxu0 %v270
    %v366 = vpop.f32.mrf.mxu0
    %v367 = vadd.f32 %v242, %v366
    %v368 = vpop.f32.mrf.mxu0
    %369 = vmatprep.mubr.f32.mxu0 0.0
    %370 = vmatmul.mubr.f32.gmra.mxu0 %v273
    %v371 = vpop.f32.mrf.mxu0
    %v372 = vadd.f32 %v247, %v371
    %v373 = vpop.f32.mrf.mxu0
    %374 = vmatprep.mubr.f32.mxu0 0.0
    %375 = vmatmul.mubr.f32.gmra.mxu0 %v276
    %v376 = vpop.f32.mrf.mxu0
    %v377 = vadd.f32 %v252, %v376
    %v378 = vpop.f32.mrf.mxu0
    %379 = vmatprep.mubr.f32.mxu0 0.0
    %380 = vmatmul.mubr.f32.gmra.mxu0 %v279
    %v381 = vpop.f32.mrf.mxu0
    %v382 = vadd.f32 %v257, %v381
    %v383 = vpop.f32.mrf.mxu0
    %384 = vdwg.mxu0
    %v385 = vmax.f32 %v352, 0.0
    %v386 = vmax.f32 %v357, 0.0
    %v387 = vmax.f32 %v362, 0.0
    %v388 = vmax.f32 %v367, 0.0
    %v389 = vmax.f32 %v372, 0.0
    %v390 = vmax.f32 %v377, 0.0
    %v391 = vmax.f32 %v382, 0.0
    %v392 = vld [vmem:[%s5] sm:$0x3]
    %v393 = vld [vmem:[%s6] sm:$0x3]
    %395 = vset.pattern.permute.xlu0 0
    %396 = vperm.xlu0 %395, %v393
    %v397 = vpop.permute.xlu0 %396
    %v400 = vsel %vm259, %v392, 0
    %v403 = vsel %vm281, %v391, 0
    %405 = vmatprep.subr.mxu0 0.0
    %406 = vmatpush1.msra.mxu0 0.0
    %407 = vmatprep.subr.mxu0 0.0
    %408 = vmatpush1.msra.mxu0 0.0
    %409 = vmatprep.subr.mxu0 0.0
    %410 = vmatpush1.msra.mxu0 0.0
    %411 = vmatprep.subr.mxu0 0.0
    %412 = vmatpush1.msra.mxu0 0.0
    %413 = vmatprep.subr.mxu0 0.0
    %414 = vmatpush1.msra.mxu0 0.0
    %415 = vmatprep.subr.mxu0 0.0
    %416 = vmatpush1.msra.mxu0 0.0
    %417 = vmatprep.subr.mxu0 0.0
    %418 = vmatpush1.msra.mxu0 0.0
    %419 = vmatprep.subr.mxu0 0.0
    %420 = vmatpush1.msra.mxu0 0.0
    %421 = vmatprep.subr.mxu0 0.0
    %422 = vmatpush1.msra.mxu0 0.0
    %423 = vmatprep.subr.mxu0 0.0
    %424 = vmatpush1.msra.mxu0 %v403
    %425 = vmatprep.subr.mxu0 0.0
    %426 = vmatpush1.msra.mxu0 %v390
    %427 = vmatprep.subr.mxu0 0.0
    %428 = vmatpush1.msra.mxu0 %v389
    %429 = vmatprep.subr.mxu0 0.0
    %430 = vmatpush1.msra.mxu0 %v388
    %431 = vmatprep.subr.mxu0 0.0
    %432 = vmatpush1.msra.mxu0 %v387
    %433 = vmatprep.subr.mxu0 0.0
    %434 = vmatpush1.msra.mxu0 %v386
    %435 = vmatprep.subr.mxu0 0.0
    %436 = vmatpush1.msra.mxu0 %v385
    %437 = vmatprep.subr.mxu0 0.0
    %438 = vmatpush2.msra.mxu0 0.0
    %439 = vmatprep.subr.mxu0 0.0
    %440 = vmatpush2.msra.mxu0 0.0
    %441 = vmatprep.subr.mxu0 0.0
    %442 = vmatpush2.msra.mxu0 0.0
    %443 = vmatprep.subr.mxu0 0.0
    %444 = vmatpush2.msra.mxu0 0.0
    %445 = vmatprep.subr.mxu0 0.0
    %446 = vmatpush2.msra.mxu0 0.0
    %447 = vmatprep.subr.mxu0 0.0
    %448 = vmatpush2.msra.mxu0 0.0
    %449 = vmatprep.subr.mxu0 0.0
    %450 = vmatpush2.msra.mxu0 0.0
    %451 = vmatprep.subr.mxu0 0.0
    %452 = vmatpush2.msra.mxu0 0.0
    %453 = vmatprep.subr.mxu0 0.0
    %454 = vmatpush2.msra.mxu0 0.0
    %455 = vmatprep.subr.mxu0 0.0
    %456 = vmatpush2.msra.mxu0 0.0
    %457 = vmatprep.subr.mxu0 0.0
    %458 = vmatpush2.msra.mxu0 0.0
    %459 = vmatprep.subr.mxu0 0.0
    %460 = vmatpush2.msra.mxu0 0.0
    %461 = vmatprep.subr.mxu0 0.0
    %462 = vmatpush2.msra.mxu0 0.0
    %463 = vmatprep.subr.mxu0 0.0
    %464 = vmatpush2.msra.mxu0 0.0
    %465 = vmatprep.subr.mxu0 0.0
    %466 = vmatpush2.msra.mxu0 0.0
    %467 = vmatprep.subr.mxu0 0.0
    %468 = vmatpush2.msra.mxu0 0.0
    %469 = vmatprep.mubr.f32.mxu0 0.0
    %470 = vmatmul.mubr.f32.gmra.mxu0 %v400
    %v471 = vpop.f32.mrf.mxu0
    %v472 = vadd.f32 %v397, %v471
    %v473 = vpop.f32.mrf.mxu0
    %474 = vdwg.mxu0
    %vm475 = vcmp.gt.f32.partialorder %v472, 20.0
    %v476 = vmin.f32 %v472, 20.0
    %v477 = vmul.f32 %v476, 1.442695
    %v478 = vpow.pop %v477
    %v479 = vadd.f32 %v478, 1.0
    %v480 = vlog2.pop %v479
    %v481 = vmul.f32 %v480, 0.6931472
    %v482 = vmul.f32 -0.5, %v478
    %v483 = vadd.f32 %v482, 1.0
    %v484 = vmul.f32 %v483, %v478
    %v485 = vand.u32 2147483647, %v478
    %vm486 = vcmp.lt.f32.partialorder %v485, 0.0004427343
    %v487 = vsel %vm486, %v484, %v481
    %v488 = vsel %vm475, %v472, %v487
    %v489 = vlaneseq
    %v490 = vshrl.u32 %v489, 7
    %vm491 = vcmp.eq.s32.totalorder %v490, 1
    %v492 = vsel %vm491, %v488, %v472
    %493 = vst [vmem:[#allocation2] sm:$0x3] %v492
    // Predicated region
    $region30: #{tpu_custom_call.1} parent=1 // pred_check
      _
    $region31: #{tpu_custom_call.1} parent=1 // pred_check_branch
      %495 = sbr.rel (0) target = $region33
    $region32: #{tpu_custom_call.1} parent=1 // pred_region
      %s497 = ssub.s32 32, 32
      %498 = vsyncadd [#allocation3], %s497
      %s500 = sshll.u32 [#allocation2], 4
      %s501 = int_to_ptr.vmem [resolvable:$true] %s500
      %503 = dma.vmem_to_hbm [thread:$0]  %s501, 32, %s7, [#allocation3]
    $region33: #{tpu_custom_call.1} parent=1 // pred_fallthru
      _
    // Predicated region
    $region34: #{tpu_custom_call.1} parent=1 // pred_check
      _
    $region35: #{tpu_custom_call.1} parent=1 // pred_check_branch
      %505 = sbr.rel (0) target = $region37
    $region36: #{tpu_custom_call.1} parent=1 // pred_region
      %506 = dma.done [#allocation3], 32
    $region37: #{tpu_custom_call.1} parent=1 // pred_fallthru
      _
    %507 = vsyncpa [#allocation3], 1

</llo_original>
